<compile_context>
chip_gen: v5e
topology: v5e:2x2
jax: 0.10.0
libtpu: 0.0.40
codegen_flags: <defaults>
</compile_context>

<pallas_src>
import jax
import jax.numpy as jnp
from jax.experimental import pallas as pl
from jax.experimental.pallas import tpu as pltpu

_SUBLANE_BF16 = 16  # bf16 packs 16 sublanes per vreg; tile batch in multiples of 16


def _round_up(n, m):
    return ((n + m - 1) // m) * m


def _choose_batch_tile(batch, block_b):
    """Pick the batch tile TB and padded batch Bp."""
    bp_min = _round_up(batch, _SUBLANE_BF16)
    n_tiles = pl.cdiv(bp_min, block_b)
    # For moderate/large batches force >= 2 grid steps so the "parallel" axis
    # can be split across v7x's two TensorCores (no effect on v5e/v6e).
    if bp_min >= 256:
        n_tiles = max(n_tiles, 2)
    tb = _round_up(pl.cdiv(bp_min, n_tiles), _SUBLANE_BF16)
    bp = _round_up(batch, tb)
    return tb, bp


def _mlp_kernel(x_ref, w1_ref, b1_ref, w2_ref, b2_ref, w3_ref, b3_ref, o_ref):
    # x_ref: (TB, in_dim) f32 ; weights bf16 ; biases f32 rows ; o_ref: (TB, out_dim)
    x = x_ref[...].astype(jnp.bfloat16)

    # Layer 1: Linear + ReLU  (MXU bf16 -> f32 acc, epilogue on VPU in f32)
    h1 = jnp.dot(x, w1_ref[...], preferred_element_type=jnp.float32)
    h1 = jnp.maximum(h1 + b1_ref[...], 0.0)

    # Layer 2: Linear + ReLU
    h2 = jnp.dot(h1.astype(jnp.bfloat16), w2_ref[...],
                 preferred_element_type=jnp.float32)
    h2 = jnp.maximum(h2 + b2_ref[...], 0.0)

    # Layer 3: Linear (only the real out_dim columns are stored)
    y = jnp.dot(h2.astype(jnp.bfloat16), w3_ref[...],
                preferred_element_type=jnp.float32)
    o_ref[...] = (y + b3_ref[...]).astype(o_ref.dtype)


def prepare_params(params):
    """One-time cast of params into kernel-ready dtypes (hoisted out of forward)."""
    return {
        "w1": params["w1"].astype(jnp.bfloat16),
        "b1": params["b1"].astype(jnp.float32),
        "w2": params["w2"].astype(jnp.bfloat16),
        "b2": params["b2"].astype(jnp.float32),
        "w3": params["w3"].astype(jnp.bfloat16),
        "b3": params["b3"].astype(jnp.float32),
    }


def neural_network_forward(x, prepped, *, block_b=2048, out_dtype=jnp.float32):
    """Fused 3-layer MLP forward.

    x: (..., in_dim) float array.
    prepped: output of prepare_params (bf16 weights, f32 biases).
    Returns (..., out_dim) array of out_dtype (default float32).
    """
    w1, b1 = prepped["w1"], prepped["b1"]
    w2, b2 = prepped["w2"], prepped["b2"]
    w3, b3 = prepped["w3"], prepped["b3"]

    in_dim = w1.shape[0]
    hidden = w1.shape[1]
    out_dim = w3.shape[1]

    # Flatten leading dims (PyTorch Linear semantics on arbitrary batch dims).
    lead_shape = x.shape[:-1]
    x2 = x.reshape(-1, in_dim).astype(jnp.float32)
    B = x2.shape[0]

    TB, Bp = _choose_batch_tile(B, block_b)
    if Bp != B:
        x2 = jnp.pad(x2, ((0, Bp - B), (0, 0)))

    grid = (Bp // TB,)

    out = pl.pallas_call(
        _mlp_kernel,
        out_shape=jax.ShapeDtypeStruct((Bp, out_dim), out_dtype),
        grid=grid,
        in_specs=[
            # activations: tiled along the batch axis, unpadded feature dim
            pl.BlockSpec((TB, in_dim), lambda i: (i, 0)),
            # weights / biases: constant block index -> VMEM-resident across grid
            pl.BlockSpec((in_dim, hidden), lambda i: (0, 0)),
            pl.BlockSpec((1, hidden), lambda i: (0, 0)),
            pl.BlockSpec((hidden, hidden), lambda i: (0, 0)),
            pl.BlockSpec((1, hidden), lambda i: (0, 0)),
            pl.BlockSpec((hidden, out_dim), lambda i: (0, 0)),
            pl.BlockSpec((1, out_dim), lambda i: (0, 0)),
        ],
        out_specs=pl.BlockSpec((TB, out_dim), lambda i: (i, 0)),
        compiler_params=pltpu.CompilerParams(
            dimension_semantics=("parallel",)),
    )(x2, w1, b1, w2, b2, w3, b3)

    if Bp != B:
        out = out[:B]
    return out.reshape(*lead_shape, out_dim)


def init_params(key, in_dim, out_dim, hidden=128):
    """Deterministic PyTorch-style init: U(-1/sqrt(fan_in), +1/sqrt(fan_in))."""
    ks = jax.random.split(key, 6)

    def lin(kw, kb, fan_in, fan_out):
        bound = 1.0 / jnp.sqrt(fan_in)
        w = jax.random.uniform(kw, (fan_in, fan_out), jnp.float32, -bound, bound)
        b = jax.random.uniform(kb, (1, fan_out), jnp.float32, -bound, bound)
        return w, b

    w1, b1 = lin(ks[0], ks[1], in_dim, hidden)
    w2, b2 = lin(ks[2], ks[3], hidden, hidden)
    w3, b3 = lin(ks[4], ks[5], hidden, out_dim)
    return {"w1": w1, "b1": b1, "w2": w2, "b2": b2, "w3": w3, "b3": b3}


def reference_forward_bf16(x, p):
    """Reference matching the kernel numerics: bf16 matmul inputs, f32 acc."""
    def mm(a, w):
        return jnp.dot(a.astype(jnp.bfloat16), w.astype(jnp.bfloat16),
                       preferred_element_type=jnp.float32)
    h1 = jnp.maximum(mm(x, p["w1"]) + p["b1"], 0.0)
    h2 = jnp.maximum(mm(h1, p["w2"]) + p["b2"], 0.0)
    return mm(h2, p["w3"]) + p["b3"]


def reference_forward_f32(x, p):
    h1 = jnp.maximum(x @ p["w1"] + p["b1"], 0.0)
    h2 = jnp.maximum(h1 @ p["w2"] + p["b2"], 0.0)
    return h2 @ p["w3"] + p["b3"]


if __name__ == "__main__":
    key = jax.random.PRNGKey(0)
    k_x1, k_x2, k_p = jax.random.split(key, 3)

    in_dim, out_dim = 16, 4   # e.g. an RL state -> Q-values head
    params = init_params(k_p, in_dim, out_dim)
    prepped = prepare_params(params)   # one-time cast, reused across calls

    # Small batch (original RL-step case; single grid point).
    x_small = jax.random.normal(k_x1, (8, in_dim), jnp.float32)
    out_small = jax.block_until_ready(neural_network_forward(x_small, prepped))
    ref_small = reference_forward_bf16(x_small, params)
    assert out_small.shape == (8, out_dim)
    assert jnp.allclose(out_small, ref_small, atol=2e-3, rtol=2e-3)
    assert jnp.allclose(out_small, reference_forward_f32(x_small, params),
                        atol=5e-2, rtol=5e-2)

    # Larger, non-multiple batch: exercises batch tiling (grid = 2) + padding.
    x_big = jax.random.normal(k_x2, (260, in_dim), jnp.float32)
    out_big = jax.block_until_ready(neural_network_forward(x_big, prepped))
    ref_big = reference_forward_bf16(x_big, params)
    assert out_big.shape == (260, out_dim)
    assert jnp.allclose(out_big, ref_big, atol=2e-3, rtol=2e-3)

    print("KERNEL_OK")
</pallas_src>

<mosaic_0001>
module attributes {stable_mosaic.version = 11 : i64} {
  func.func @_mlp_kernel(%arg0: i32, %arg1: memref<16x16xf32, #tpu.memory_space<vmem>>, %arg2: memref<16x128xbf16, #tpu.memory_space<vmem>>, %arg3: memref<1x128xf32, #tpu.memory_space<vmem>>, %arg4: memref<128x128xbf16, #tpu.memory_space<vmem>>, %arg5: memref<1x128xf32, #tpu.memory_space<vmem>>, %arg6: memref<128x4xbf16, #tpu.memory_space<vmem>>, %arg7: memref<1x4xf32, #tpu.memory_space<vmem>>, %arg8: memref<16x4xf32, #tpu.memory_space<vmem>>) attributes {dimension_semantics = [#tpu.dimension_semantics<parallel>], iteration_bounds = array<i64: 1>, scalar_prefetch = 0 : i64, scratch_operands = 0 : i64, tpu.core_type = #tpu.core_type<tc>, window_params = [{transform_indices = @transform_0, window_bounds = array<i64: 16, 16>}, {pipeline_mode = #tpu.pipeline_mode<synchronous>, transform_indices = @transform_1, window_bounds = array<i64: 16, 128>}, {pipeline_mode = #tpu.pipeline_mode<synchronous>, transform_indices = @transform_2, window_bounds = array<i64: 1, 128>}, {pipeline_mode = #tpu.pipeline_mode<synchronous>, transform_indices = @transform_3, window_bounds = array<i64: 128, 128>}, {pipeline_mode = #tpu.pipeline_mode<synchronous>, transform_indices = @transform_4, window_bounds = array<i64: 1, 128>}, {pipeline_mode = #tpu.pipeline_mode<synchronous>, transform_indices = @transform_5, window_bounds = array<i64: 128, 4>}, {pipeline_mode = #tpu.pipeline_mode<synchronous>, transform_indices = @transform_6, window_bounds = array<i64: 1, 4>}, {transform_indices = @transform_7, window_bounds = array<i64: 16, 4>}]} {
    %c0 = arith.constant 0 : index
    %c0_0 = arith.constant 0 : index
    %0 = vector.load %arg1[%c0, %c0_0] : memref<16x16xf32, #tpu.memory_space<vmem>>, vector<16x16xf32>
    %1 = arith.truncf %0 : vector<16x16xf32> to vector<16x16xbf16>
    %c0_1 = arith.constant 0 : index
    %c0_2 = arith.constant 0 : index
    %2 = vector.load %arg2[%c0_1, %c0_2] : memref<16x128xbf16, #tpu.memory_space<vmem>>, vector<16x128xbf16>
    %cst = arith.constant dense<0.000000e+00> : vector<16x128xf32>
    %3 = tpu.matmul %1, %2, %cst {dimension_numbers = #tpu.dot_dimension_numbers<[1], [0], [0], [1], [0, 0, 1, 1], [], []>} : vector<16x16xbf16>, vector<16x128xbf16>, vector<16x128xf32> -> vector<16x128xf32>
    %c0_3 = arith.constant 0 : index
    %c0_4 = arith.constant 0 : index
    %4 = vector.load %arg3[%c0_3, %c0_4] : memref<1x128xf32, #tpu.memory_space<vmem>>, vector<1x128xf32>
    %5 = vector.broadcast %4 : vector<1x128xf32> to vector<16x128xf32>
    %6 = arith.addf %3, %5 : vector<16x128xf32>
    %cst_5 = arith.constant 0.000000e+00 : f32
    %7 = vector.broadcast %cst_5 : f32 to vector<16x128xf32>
    %8 = arith.maximumf %6, %7 : vector<16x128xf32>
    %9 = arith.truncf %8 : vector<16x128xf32> to vector<16x128xbf16>
    %c0_6 = arith.constant 0 : index
    %c0_7 = arith.constant 0 : index
    %10 = vector.load %arg4[%c0_6, %c0_7] : memref<128x128xbf16, #tpu.memory_space<vmem>>, vector<128x128xbf16>
    %cst_8 = arith.constant dense<0.000000e+00> : vector<16x128xf32>
    %11 = tpu.matmul %9, %10, %cst_8 {dimension_numbers = #tpu.dot_dimension_numbers<[1], [0], [0], [1], [0, 0, 1, 1], [], []>} : vector<16x128xbf16>, vector<128x128xbf16>, vector<16x128xf32> -> vector<16x128xf32>
    %c0_9 = arith.constant 0 : index
    %c0_10 = arith.constant 0 : index
    %12 = vector.load %arg5[%c0_9, %c0_10] : memref<1x128xf32, #tpu.memory_space<vmem>>, vector<1x128xf32>
    %13 = vector.broadcast %12 : vector<1x128xf32> to vector<16x128xf32>
    %14 = arith.addf %11, %13 : vector<16x128xf32>
    %cst_11 = arith.constant 0.000000e+00 : f32
    %15 = vector.broadcast %cst_11 : f32 to vector<16x128xf32>
    %16 = arith.maximumf %14, %15 : vector<16x128xf32>
    %17 = arith.truncf %16 : vector<16x128xf32> to vector<16x128xbf16>
    %c0_12 = arith.constant 0 : index
    %c0_13 = arith.constant 0 : index
    %18 = vector.load %arg6[%c0_12, %c0_13] : memref<128x4xbf16, #tpu.memory_space<vmem>>, vector<128x4xbf16>
    %cst_14 = arith.constant dense<0.000000e+00> : vector<16x4xf32>
    %19 = tpu.matmul %17, %18, %cst_14 {dimension_numbers = #tpu.dot_dimension_numbers<[1], [0], [0], [1], [0, 0, 1, 1], [], []>} : vector<16x128xbf16>, vector<128x4xbf16>, vector<16x4xf32> -> vector<16x4xf32>
    %c0_15 = arith.constant 0 : index
    %c0_16 = arith.constant 0 : index
    %20 = vector.load %arg7[%c0_15, %c0_16] : memref<1x4xf32, #tpu.memory_space<vmem>>, vector<1x4xf32>
    %21 = vector.broadcast %20 : vector<1x4xf32> to vector<16x4xf32>
    %22 = arith.addf %19, %21 : vector<16x4xf32>
    %c0_17 = arith.constant 0 : index
    %c0_18 = arith.constant 0 : index
    %23 = vector.load %arg8[%c0_17, %c0_18] : memref<16x4xf32, #tpu.memory_space<vmem>>, vector<16x4xf32>
    tpu.vector_store %arg8[%c0_17, %c0_18], %22 {strides = array<i32>} : memref<16x4xf32, #tpu.memory_space<vmem>>, vector<16x4xf32>,
    return
  }
  func.func @transform_0(%arg0: i32) -> (i32, i32) {
    %c0_i32 = arith.constant 0 : i32
    %c0_i32_0 = arith.constant 0 : i32
    return %arg0, %c0_i32 : i32, i32
  }
  func.func @transform_1(%arg0: i32) -> (i32, i32) {
    %c0_i32 = arith.constant 0 : i32
    %c0_i32_0 = arith.constant 0 : i32
    %c0_i32_1 = arith.constant 0 : i32
    return %c0_i32, %c0_i32_0 : i32, i32
  }
  func.func @transform_2(%arg0: i32) -> (i32, i32) {
    %c0_i32 = arith.constant 0 : i32
    %c0_i32_0 = arith.constant 0 : i32
    %c0_i32_1 = arith.constant 0 : i32
    return %c0_i32, %c0_i32_0 : i32, i32
  }
  func.func @transform_3(%arg0: i32) -> (i32, i32) {
    %c0_i32 = arith.constant 0 : i32
    %c0_i32_0 = arith.constant 0 : i32
    %c0_i32_1 = arith.constant 0 : i32
    return %c0_i32, %c0_i32_0 : i32, i32
  }
  func.func @transform_4(%arg0: i32) -> (i32, i32) {
    %c0_i32 = arith.constant 0 : i32
    %c0_i32_0 = arith.constant 0 : i32
    %c0_i32_1 = arith.constant 0 : i32
    return %c0_i32, %c0_i32_0 : i32, i32
  }
  func.func @transform_5(%arg0: i32) -> (i32, i32) {
    %c0_i32 = arith.constant 0 : i32
    %c0_i32_0 = arith.constant 0 : i32
    %c0_i32_1 = arith.constant 0 : i32
    return %c0_i32, %c0_i32_0 : i32, i32
  }
  func.func @transform_6(%arg0: i32) -> (i32, i32) {
    %c0_i32 = arith.constant 0 : i32
    %c0_i32_0 = arith.constant 0 : i32
    %c0_i32_1 = arith.constant 0 : i32
    return %c0_i32, %c0_i32_0 : i32, i32
  }
  func.func @transform_7(%arg0: i32) -> (i32, i32) {
    %c0_i32 = arith.constant 0 : i32
    %c0_i32_0 = arith.constant 0 : i32
    return %arg0, %c0_i32 : i32, i32
  }
}

</mosaic_0001>

<llo_original>
// kernel: tpu_custom_call.1
$region0: #{tpu_custom_call.1}
  #allocation0 [shape = 'u32[]', space=smem, size = 0x4, offset = 0x4, fixed_abs, tag = 'smem constant byte address 0x4 - core index']
  #allocation1 [shape = 'u32[72,128]{1,0:T(1,128)}', space=vmem, size = 0x9000, scoped, tag = 'internal scratch']
  %s0 = inlined_call_operand.hbm [shape: f32[16,16], index: 0, kind: input, shape index: {}]
  %s1 = inlined_call_operand.hbm [shape: bf16[16,128], index: 1, kind: input, shape index: {}]
  %s2 = inlined_call_operand.vmem [shape: f32[1,128], index: 2, kind: input, shape index: {}]
  %s3 = inlined_call_operand.vmem [shape: bf16[128,128], index: 3, kind: input, shape index: {}]
  %s4 = inlined_call_operand.vmem [shape: f32[1,128], index: 4, kind: input, shape index: {}]
  %s5 = inlined_call_operand.vmem [shape: bf16[128,4], index: 5, kind: input, shape index: {}]
  %s6 = inlined_call_operand.vmem [shape: f32[1,4], index: 6, kind: input, shape index: {}]
  %s7 = inlined_call_operand.vmem [shape: f32[16,4], index: 7, kind: output, shape index: {}]
  %s8 = sld [smem:[#allocation0]]
  $region46: #{tpu_custom_call.1} parent=0
    _
  %s10 = ssub.s32 1, %s8
  %s11 = scalar_select 0, %s10, %s8
  $region1: #{tpu_custom_call.1} parent=0
    #allocation2 [shape = 'u8[8192]{0}', space=vmem, size = 0x2000, scoped, tag = 'input window, operand 0, single buffered']
    #allocation3 [shape = 's32[1]{0}', space=sflag, size = 0x4, scoped, tag = 'scoped memory for tpu_custom_call.1']
    #allocation4 [shape = 'u8[4096]{0}', space=vmem, size = 0x1000, scoped, tag = 'input window, operand 1, single buffered']
    #allocation5 [shape = 's32[1]{0}', space=sflag, size = 0x4, scoped, tag = 'scoped memory for tpu_custom_call.1']
    %12 = vsyncpa [#allocation3], 0
    %13 = vsyncpa [#allocation5], 0
    // Predicated region
    $region2: #{tpu_custom_call.1} parent=1 // pred_check
      _
    $region3: #{tpu_custom_call.1} parent=1 // pred_check_branch
      %15 = sbr.rel (0) target = $region5
    $region4: #{tpu_custom_call.1} parent=1 // pred_region
      %17 = vsyncadd [#allocation3], 0
      %s18 = sshll.u32 %s0, 4
      %s19 = int_to_ptr.hbm [resolvable:$true] %s18
      %s20 = sshll.u32 [#allocation2], 4
      %s21 = int_to_ptr.vmem [resolvable:$true] %s20
      %26 = dma.hbm_to_vmem [thread:$0]  %s19, 256, %s21, [#allocation3], 128, 128, 8
    $region5: #{tpu_custom_call.1} parent=1 // pred_fallthru
      _
    // Predicated region
    $region6: #{tpu_custom_call.1} parent=1 // pred_check
      _
    $region7: #{tpu_custom_call.1} parent=1 // pred_check_branch
      %28 = sbr.rel (0) target = $region9
    $region8: #{tpu_custom_call.1} parent=1 // pred_region
      %30 = vsyncadd [#allocation5], 0
      %s31 = sshll.u32 %s1, 4
      %s32 = int_to_ptr.hbm [resolvable:$true] %s31
      %s33 = sshll.u32 [#allocation4], 4
      %s34 = int_to_ptr.vmem [resolvable:$true] %s33
      %39 = dma.hbm_to_vmem [thread:$0]  %s32, 128, %s34, [#allocation5], 64, 64, 4
    $region9: #{tpu_custom_call.1} parent=1 // pred_fallthru
      _
    // Predicated region
    $region10: #{tpu_custom_call.1} parent=1 // pred_check
      _
    $region11: #{tpu_custom_call.1} parent=1 // pred_check_branch
      %41 = sbr.rel (0) target = $region13
    $region12: #{tpu_custom_call.1} parent=1 // pred_region
      _
    $region13: #{tpu_custom_call.1} parent=1 // pred_fallthru
      _
    // Predicated region
    $region14: #{tpu_custom_call.1} parent=1 // pred_check
      _
    $region15: #{tpu_custom_call.1} parent=1 // pred_check_branch
      %43 = sbr.rel (0) target = $region17
    $region16: #{tpu_custom_call.1} parent=1 // pred_region
      _
    $region17: #{tpu_custom_call.1} parent=1 // pred_fallthru
      _
    // Predicated region
    $region18: #{tpu_custom_call.1} parent=1 // pred_check
      _
    $region19: #{tpu_custom_call.1} parent=1 // pred_check_branch
      %45 = sbr.rel (0) target = $region21
    $region20: #{tpu_custom_call.1} parent=1 // pred_region
      _
    $region21: #{tpu_custom_call.1} parent=1 // pred_fallthru
      _
    // Predicated region
    $region22: #{tpu_custom_call.1} parent=1 // pred_check
      _
    $region23: #{tpu_custom_call.1} parent=1 // pred_check_branch
      %47 = sbr.rel (0) target = $region25
    $region24: #{tpu_custom_call.1} parent=1 // pred_region
      _
    $region25: #{tpu_custom_call.1} parent=1 // pred_fallthru
      _
    // Predicated region
    $region26: #{tpu_custom_call.1} parent=1 // pred_check
      _
    $region27: #{tpu_custom_call.1} parent=1 // pred_check_branch
      %49 = sbr.rel (0) target = $region29
    $region28: #{tpu_custom_call.1} parent=1 // pred_region
      _
    $region29: #{tpu_custom_call.1} parent=1 // pred_fallthru
      _
    // Predicated region
    $region30: #{tpu_custom_call.1} parent=1 // pred_check
      _
    $region31: #{tpu_custom_call.1} parent=1 // pred_check_branch
      %51 = sbr.rel (0) target = $region33
    $region32: #{tpu_custom_call.1} parent=1 // pred_region
      %53 = dma.done [#allocation3], 256
    $region33: #{tpu_custom_call.1} parent=1 // pred_fallthru
      _
    // Predicated region
    $region34: #{tpu_custom_call.1} parent=1 // pred_check
      _
    $region35: #{tpu_custom_call.1} parent=1 // pred_check_branch
      %55 = sbr.rel (0) target = $region37
    $region36: #{tpu_custom_call.1} parent=1 // pred_region
      %57 = dma.done [#allocation5], 128
    $region37: #{tpu_custom_call.1} parent=1 // pred_fallthru
      _
    %v59 = vld [vmem:[#allocation2] sm:$0xff]
    %v60 = vld [vmem:[#allocation2 + $0x8] sm:$0xff]
    %v61 = vpack.c.bf16 %v60, %v59
    %v62 = vld [vmem:[#allocation4] sm:$0xf]
    %v63 = vld [vmem:[#allocation4 + $0x4] sm:$0xf]
    %v64 = vld [vmem:[%s2] sm:$0x1]
    %v66 = vperm.slane %v64, 0
    %v70 = vunpack.c.l.b16 %v62
    %v71 = vunpack.c.l.b16 %v63
    %v72 = vpack.c.b16 %v71, %v70
    %vm74 = vcmask 130048
    %v76 = vsel %vm74, %v61, 0
    %78 = vmatpush.bf16.msra.mxu0 0
    %79 = vmatpush.bf16.msra.mxu0 0
    %80 = vmatpush.bf16.msra.mxu0 0
    %81 = vmatpush.bf16.msra.mxu0 0
    %82 = vmatpush.bf16.msra.mxu0 0
    %83 = vmatpush.bf16.msra.mxu0 0
    %84 = vmatpush.bf16.msra.mxu0 0
    %85 = vmatpush.bf16.msra.mxu0 %v72
    %86 = vmatmul.bf16.gmra.mxu0 %v76
    %v87 = vpop.f32.mrf.mxu0
    %v88 = vadd.f32 %v66, %v87
    %v89 = vpop.f32.mrf.mxu0
    %v90 = vadd.f32 %v66, %v89
    %91 = vdwg.mxu0
    %v92 = vmax.f32 %v88, 0.0
    %v93 = vmax.f32 %v90, 0.0
    %v94 = vpack.c.bf16 %v93, %v92
    %v95 = vld [vmem:[%s3] sm:$0xf]
    %v96 = vld [vmem:[%s3 + $0x4] sm:$0xf]
    %v97 = vld [vmem:[%s3 + $0x8] sm:$0xf]
    %v98 = vld [vmem:[%s3 + $0xc] sm:$0xf]
    %v99 = vld [vmem:[%s3 + $0x10] sm:$0xf]
    %v100 = vld [vmem:[%s3 + $0x14] sm:$0xf]
    %v101 = vld [vmem:[%s3 + $0x18] sm:$0xf]
    %v102 = vld [vmem:[%s3 + $0x1c] sm:$0xf]
    %v103 = vld [vmem:[%s3 + $0x20] sm:$0xf]
    %v104 = vld [vmem:[%s3 + $0x24] sm:$0xf]
    %v105 = vld [vmem:[%s3 + $0x28] sm:$0xf]
    %v106 = vld [vmem:[%s3 + $0x2c] sm:$0xf]
    %v107 = vld [vmem:[%s3 + $0x30] sm:$0xf]
    %v108 = vld [vmem:[%s3 + $0x34] sm:$0xf]
    %v109 = vld [vmem:[%s3 + $0x38] sm:$0xf]
    %v110 = vld [vmem:[%s3 + $0x3c] sm:$0xf]
    %v111 = vld [vmem:[%s4] sm:$0x1]
    %v113 = vperm.slane %v111, 0
    %v131 = vunpack.c.l.b16 %v95
    %v132 = vunpack.c.l.b16 %v96
    %v133 = vunpack.c.l.b16 %v97
    %v134 = vunpack.c.l.b16 %v98
    %v135 = vunpack.c.l.b16 %v99
    %v136 = vunpack.c.l.b16 %v100
    %v137 = vunpack.c.l.b16 %v101
    %v138 = vunpack.c.l.b16 %v102
    %v139 = vunpack.c.l.b16 %v103
    %v140 = vunpack.c.l.b16 %v104
    %v141 = vunpack.c.l.b16 %v105
    %v142 = vunpack.c.l.b16 %v106
    %v143 = vunpack.c.l.b16 %v107
    %v144 = vunpack.c.l.b16 %v108
    %v145 = vunpack.c.l.b16 %v109
    %v146 = vunpack.c.l.b16 %v110
    %v147 = vpack.c.b16 %v132, %v131
    %v148 = vpack.c.b16 %v134, %v133
    %v149 = vpack.c.b16 %v136, %v135
    %v150 = vpack.c.b16 %v138, %v137
    %v151 = vpack.c.b16 %v140, %v139
    %v152 = vpack.c.b16 %v142, %v141
    %v153 = vpack.c.b16 %v144, %v143
    %v154 = vpack.c.b16 %v146, %v145
    %163 = vmatpush.bf16.msra.mxu0 %v154
    %164 = vmatpush.bf16.msra.mxu0 %v153
    %165 = vmatpush.bf16.msra.mxu0 %v152
    %166 = vmatpush.bf16.msra.mxu0 %v151
    %167 = vmatpush.bf16.msra.mxu0 %v150
    %168 = vmatpush.bf16.msra.mxu0 %v149
    %169 = vmatpush.bf16.msra.mxu0 %v148
    %170 = vmatpush.bf16.msra.mxu0 %v147
    %171 = vmatmul.bf16.gmra.mxu0 %v94
    %v172 = vpop.f32.mrf.mxu0
    %v173 = vadd.f32 %v113, %v172
    %v174 = vpop.f32.mrf.mxu0
    %v175 = vadd.f32 %v113, %v174
    %176 = vdwg.mxu0
    %v177 = vmax.f32 %v173, 0.0
    %v178 = vmax.f32 %v175, 0.0
    %v179 = vpack.c.bf16 %v178, %v177
    %v180 = vld [vmem:[%s5] sm:$0xf]
    %v181 = vld [vmem:[%s5 + $0x4] sm:$0xf]
    %v182 = vld [vmem:[%s5 + $0x8] sm:$0xf]
    %v183 = vld [vmem:[%s5 + $0xc] sm:$0xf]
    %v184 = vld [vmem:[%s5 + $0x10] sm:$0xf]
    %v185 = vld [vmem:[%s5 + $0x14] sm:$0xf]
    %v186 = vld [vmem:[%s5 + $0x18] sm:$0xf]
    %v187 = vld [vmem:[%s5 + $0x1c] sm:$0xf]
    %v188 = vld [vmem:[%s5 + $0x20] sm:$0xf]
    %v189 = vld [vmem:[%s5 + $0x24] sm:$0xf]
    %v190 = vld [vmem:[%s5 + $0x28] sm:$0xf]
    %v191 = vld [vmem:[%s5 + $0x2c] sm:$0xf]
    %v192 = vld [vmem:[%s5 + $0x30] sm:$0xf]
    %v193 = vld [vmem:[%s5 + $0x34] sm:$0xf]
    %v194 = vld [vmem:[%s5 + $0x38] sm:$0xf]
    %v195 = vld [vmem:[%s5 + $0x3c] sm:$0xf]
    %v196 = vld [vmem:[%s6] sm:$0x1]
    %v198 = vperm.slane %v196, 0
    %v216 = vunpack.c.l.b16 %v180
    %v217 = vunpack.c.l.b16 %v181
    %v218 = vunpack.c.l.b16 %v182
    %v219 = vunpack.c.l.b16 %v183
    %v220 = vunpack.c.l.b16 %v184
    %v221 = vunpack.c.l.b16 %v185
    %v222 = vunpack.c.l.b16 %v186
    %v223 = vunpack.c.l.b16 %v187
    %v224 = vunpack.c.l.b16 %v188
    %v225 = vunpack.c.l.b16 %v189
    %v226 = vunpack.c.l.b16 %v190
    %v227 = vunpack.c.l.b16 %v191
    %v228 = vunpack.c.l.b16 %v192
    %v229 = vunpack.c.l.b16 %v193
    %v230 = vunpack.c.l.b16 %v194
    %v231 = vunpack.c.l.b16 %v195
    %v232 = vpack.c.b16 %v217, %v216
    %v233 = vpack.c.b16 %v219, %v218
    %v234 = vpack.c.b16 %v221, %v220
    %v235 = vpack.c.b16 %v223, %v222
    %v236 = vpack.c.b16 %v225, %v224
    %v237 = vpack.c.b16 %v227, %v226
    %v238 = vpack.c.b16 %v229, %v228
    %v239 = vpack.c.b16 %v231, %v230
    %248 = vmatpush.bf16.msra.mxu0 %v239
    %249 = vmatpush.bf16.msra.mxu0 %v238
    %250 = vmatpush.bf16.msra.mxu0 %v237
    %251 = vmatpush.bf16.msra.mxu0 %v236
    %252 = vmatpush.bf16.msra.mxu0 %v235
    %253 = vmatpush.bf16.msra.mxu0 %v234
    %254 = vmatpush.bf16.msra.mxu0 %v233
    %255 = vmatpush.bf16.msra.mxu0 %v232
    %256 = vmatmul.bf16.gmra.mxu0 %v179
    %v257 = vpop.f32.mrf.mxu0
    %v258 = vadd.f32 %v198, %v257
    %v259 = vpop.f32.mrf.mxu0
    %v260 = vadd.f32 %v198, %v259
    %261 = vdwg.mxu0
    %vm262 = vcmask 31744
    %263 = vst.msk [vmem:[%s7] sm:$0xff] %vm262, %v258
    %264 = vst.msk [vmem:[%s7 + $0x8] sm:$0xff] %vm262, %v260
    // Predicated region
    $region38: #{tpu_custom_call.1} parent=1 // pred_check
      _
    $region39: #{tpu_custom_call.1} parent=1 // pred_check_branch
      %266 = sbr.rel (0) target = $region41
    $region40: #{tpu_custom_call.1} parent=1 // pred_region
      _
    $region41: #{tpu_custom_call.1} parent=1 // pred_fallthru
      _
    // Predicated region
    $region42: #{tpu_custom_call.1} parent=1 // pred_check
      _
    $region43: #{tpu_custom_call.1} parent=1 // pred_check_branch
      %268 = sbr.rel (0) target = $region45
    $region44: #{tpu_custom_call.1} parent=1 // pred_region
      _
    $region45: #{tpu_custom_call.1} parent=1 // pred_fallthru
      _
    %269 = vsyncpa [#allocation3], 1
    %270 = vsyncpa [#allocation5], 1

</llo_original>
